<compile_context>
chip_gen: v5e
topology: v5e:2x2
jax: 0.10.0
libtpu: 0.0.40
codegen_flags: <defaults>
</compile_context>

<pallas_src>
import jax
import jax.numpy as jnp
import numpy as np
from jax import lax
from jax.experimental import pallas as pl
from jax.experimental.pallas import tpu as pltpu

HIDDEN = 256


def _round_up(x, m):
    return ((x + m - 1) // m) * m


def _cdiv(a, b):
    return -(-a // b)


def _choose_tiling(B, tile_b_max=1024, split_threshold=512):
    """Pick (tile_b, num_tiles) for the batch grid.

    * tile_b is always a multiple of 8 (sublane granularity).
    * Small batches: one tile -- splitting only adds per-step overhead.
    * Larger batches: an even number of tiles (both v7x TensorCores busy) with
      tile_b ~ B / num_tiles so last-tile padding is < one sublane group.
    * tile_b_max is clamped so h1/h2 f32 temporaries + double buffers stay far
      below the 32 MiB scoped-VMEM default (v7x has only 64 MiB physical).
    """
    tile_b_max = max(8, min(tile_b_max, 4096))
    if B < split_threshold:
        return _round_up(max(B, 1), 8), 1
    n = max(2, _cdiv(B, tile_b_max))
    if n % 2:
        n += 1                              # even grid => even v7x TC split
    tile_b = _round_up(_cdiv(B, n), 8)
    n = max(2, _cdiv(B, tile_b))            # rounding can only shrink n
    if n % 2:
        n += 1                              # (rare) keep the grid even
    return tile_b, n


def critic_kernel(s_ref, a_ref, w1s_ref, w1a_ref, b1_ref,
                  w2_ref, b2_ref, w3_ref, b3_ref, out_ref):
    """One (tile_b, .) batch tile of the 3-layer MLP critic.

    Output is a lane-dense (1, tile_b) row (unmasked vector stores, wide
    output DMA) rather than a (tile_b, 1) column of masked 1-lane stores.
    """
    wdt = w1s_ref.dtype  # bf16 weights -> bf16 MXU inputs, f32 accumulation

    # l1: cat([s, a]) @ W1 + b1  ==  s @ W1[:sd] + a @ W1[sd:] + b1
    # (concat fused away; no HBM materialization of [state|action])
    h1 = (jnp.dot(s_ref[...].astype(wdt), w1s_ref[...],
                  preferred_element_type=jnp.float32)
          + jnp.dot(a_ref[...].astype(wdt), w1a_ref[...],
                    preferred_element_type=jnp.float32)
          + b1_ref[...])
    h1 = jnp.maximum(h1, 0.0)

    # l2: 256x256, dominant MXU cost (bf16 inputs, f32 accumulate).
    h2 = jnp.dot(h1.astype(wdt), w2_ref[...],
                 preferred_element_type=jnp.float32) + b2_ref[...]
    h2 = jnp.maximum(h2, 0.0)

    # l3: 256 -> 1 computed as  w3_row (1,256) @ h2^T (256,tile_b)
    # via dot_general contracting dims (1,1) -- same MXU pattern as q @ k^T in
    # flash attention.  Result (1, tile_b) is lane-dense for the store, no
    # (tile_b, 256) f32 temp is materialized, and w3 needs no per-step cast.
    q = lax.dot_general(w3_ref[...], h2.astype(wdt),
                        dimension_numbers=(((1,), (1,)), ((), ())),
                        preferred_element_type=jnp.float32)
    out_ref[...] = (q + b3_ref[...]).astype(out_ref.dtype)


def critic_forward(state, action, params, *, tile_b=None, tile_b_max=1024):
    """Critic.forward(state, action) -> (B, 1) Q-values."""
    w1, b1, w2, b2, w3, b3 = params
    B, state_dim = state.shape
    action_dim = action.shape[-1]
    in_dim = state_dim + action_dim

    if tile_b is None:
        tile_b, num_tiles = _choose_tiling(B, tile_b_max)
    else:  # explicit override (tests / tuning): respect it, rounded to 8
        tile_b = _round_up(min(tile_b, _round_up(B, 8)), 8)
        num_tiles = _cdiv(B, tile_b)
    b_pad = tile_b * num_tiles
    if b_pad != B:
        state = jnp.pad(state, ((0, b_pad - B), (0, 0)))
        action = jnp.pad(action, ((0, b_pad - B), (0, 0)))

    # Fuse the concat: split the first-layer weight once in the wrapper.
    w1s, w1a = w1[:state_dim], w1[state_dim:]
    w3_row = w3.reshape(1, HIDDEN)          # (256, 1) -> (1, 256) bf16 row

    grid = (num_tiles,)
    resident = lambda i: (0, 0)   # same block every step => stays in VMEM
    batched = lambda i: (i, 0)

    cost = pl.CostEstimate(
        flops=2 * b_pad * (in_dim * HIDDEN + HIDDEN * HIDDEN + HIDDEN),
        transcendentals=0,
        bytes_accessed=int(
            (w1.size + w2.size + w3.size) * jnp.dtype(w1.dtype).itemsize
            + (b1.size + b2.size + b3.size) * 4
            + b_pad * (in_dim + 1) * 4),
    )

    out = pl.pallas_call(
        critic_kernel,
        out_shape=jax.ShapeDtypeStruct((num_tiles, tile_b), jnp.float32),
        grid=grid,
        in_specs=[
            pl.BlockSpec((tile_b, state_dim), batched),     # state tile
            pl.BlockSpec((tile_b, action_dim), batched),    # action tile
            pl.BlockSpec((state_dim, HIDDEN), resident),    # W1[:sd]   bf16
            pl.BlockSpec((action_dim, HIDDEN), resident),   # W1[sd:]   bf16
            pl.BlockSpec((1, HIDDEN), resident),            # b1        f32
            pl.BlockSpec((HIDDEN, HIDDEN), resident),       # W2        bf16
            pl.BlockSpec((1, HIDDEN), resident),            # b2        f32
            pl.BlockSpec((1, HIDDEN), resident),            # W3 row    bf16
            pl.BlockSpec((1, 1), resident),                 # b3        f32
        ],
        out_specs=pl.BlockSpec((1, tile_b), batched),       # lane-dense row
        compiler_params=pltpu.CompilerParams(
            dimension_semantics=("parallel",),
            vmem_limit_bytes=32 * 1024 * 1024,
        ),
        cost_estimate=cost,
    )(state, action, w1s, w1a, b1, w2, b2, w3_row, b3)
    # (num_tiles, tile_b) lane-dense slab -> (B, 1)
    return out.reshape(b_pad, 1)[:B]


def init_critic_params(key, state_dim, action_dim, *, weight_dtype=jnp.bfloat16):
    """Mirror nn.Linear default init U(-1/sqrt(fan_in), 1/sqrt(fan_in)).

    Weights stored (in, out) so the kernel computes x @ W + b (== torch's
    x @ W.T + b); weights cast to bf16 (MXU input dtype), biases kept f32.
    """
    def linear(k, fan_in, fan_out):
        kw, kb = jax.random.split(k)
        bound = 1.0 / np.sqrt(fan_in)
        w = jax.random.uniform(kw, (fan_in, fan_out), jnp.float32, -bound, bound)
        b = jax.random.uniform(kb, (1, fan_out), jnp.float32, -bound, bound)
        return w.astype(weight_dtype), b

    k1, k2, k3 = jax.random.split(key, 3)
    in_dim = state_dim + action_dim
    w1, b1 = linear(k1, in_dim, HIDDEN)
    w2, b2 = linear(k2, HIDDEN, HIDDEN)
    w3, b3 = linear(k3, HIDDEN, 1)
    return (w1, b1, w2, b2, w3, b3)


def critic_reference(state, action, params):
    """Pure-JAX f32 reference (same bf16-rounded weights) for correctness."""
    w1, b1, w2, b2, w3, b3 = params
    f32 = lambda x: x.astype(jnp.float32)
    sa = jnp.concatenate([state, action], axis=-1)
    h1 = jnp.maximum(sa @ f32(w1) + b1, 0.0)
    h2 = jnp.maximum(h1 @ f32(w2) + b2, 0.0)
    return h2 @ f32(w3) + b3


if __name__ == "__main__":
    key = jax.random.PRNGKey(0)
    k_params, k_state, k_action = jax.random.split(key, 3)

    batch, state_dim, action_dim = 8, 24, 8
    params = init_critic_params(k_params, state_dim, action_dim)
    state = jax.random.normal(k_state, (batch, state_dim), jnp.float32)
    action = jax.random.normal(k_action, (batch, action_dim), jnp.float32)

    q1 = jax.block_until_ready(critic_forward(state, action, params))
    q1_ref = critic_reference(state, action, params)
    np.testing.assert_allclose(np.asarray(q1), np.asarray(q1_ref),
                               rtol=3e-2, atol=3e-2)
    assert q1.shape == (batch, 1)

    # Multi-step grid + batch padding (B=40 with explicit tile_b=16 -> grid=(3,)).
    k_s2, k_a2 = jax.random.split(jax.random.PRNGKey(1))
    state2 = jax.random.normal(k_s2, (40, state_dim), jnp.float32)
    action2 = jax.random.normal(k_a2, (40, action_dim), jnp.float32)
    q2 = jax.block_until_ready(critic_forward(state2, action2, params, tile_b=16))
    q2_ref = critic_reference(state2, action2, params)
    np.testing.assert_allclose(np.asarray(q2), np.asarray(q2_ref),
                               rtol=3e-2, atol=3e-2)
    assert q2.shape == (40, 1)

    # Auto tiling split path (B=600 -> even grid of two (304, .) tiles).
    k_s3, k_a3 = jax.random.split(jax.random.PRNGKey(2))
    state3 = jax.random.normal(k_s3, (600, state_dim), jnp.float32)
    action3 = jax.random.normal(k_a3, (600, action_dim), jnp.float32)
    q3 = jax.block_until_ready(critic_forward(state3, action3, params))
    q3_ref = critic_reference(state3, action3, params)
    np.testing.assert_allclose(np.asarray(q3), np.asarray(q3_ref),
                               rtol=3e-2, atol=3e-2)
    assert q3.shape == (600, 1)

    print("KERNEL_OK")
</pallas_src>

<mosaic_0001>
module attributes {stable_mosaic.version = 11 : i64} {
  func.func @critic_kernel(%arg0: i32, %arg1: memref<8x24xf32, #tpu.memory_space<vmem>>, %arg2: memref<8x8xf32, #tpu.memory_space<vmem>>, %arg3: memref<24x256xbf16, #tpu.memory_space<vmem>>, %arg4: memref<8x256xbf16, #tpu.memory_space<vmem>>, %arg5: memref<1x256xf32, #tpu.memory_space<vmem>>, %arg6: memref<256x256xbf16, #tpu.memory_space<vmem>>, %arg7: memref<1x256xf32, #tpu.memory_space<vmem>>, %arg8: memref<1x256xbf16, #tpu.memory_space<vmem>>, %arg9: memref<1x1xf32, #tpu.memory_space<vmem>>, %arg10: memref<1x8xf32, #tpu.memory_space<vmem>>) attributes {dimension_semantics = [#tpu.dimension_semantics<parallel>], iteration_bounds = array<i64: 1>, scalar_prefetch = 0 : i64, scratch_operands = 0 : i64, tpu.core_type = #tpu.core_type<tc>, window_params = [{transform_indices = @transform_0, window_bounds = array<i64: 8, 24>}, {transform_indices = @transform_1, window_bounds = array<i64: 8, 8>}, {pipeline_mode = #tpu.pipeline_mode<synchronous>, transform_indices = @transform_2, window_bounds = array<i64: 24, 256>}, {pipeline_mode = #tpu.pipeline_mode<synchronous>, transform_indices = @transform_3, window_bounds = array<i64: 8, 256>}, {pipeline_mode = #tpu.pipeline_mode<synchronous>, transform_indices = @transform_4, window_bounds = array<i64: 1, 256>}, {pipeline_mode = #tpu.pipeline_mode<synchronous>, transform_indices = @transform_5, window_bounds = array<i64: 256, 256>}, {pipeline_mode = #tpu.pipeline_mode<synchronous>, transform_indices = @transform_6, window_bounds = array<i64: 1, 256>}, {pipeline_mode = #tpu.pipeline_mode<synchronous>, transform_indices = @transform_7, window_bounds = array<i64: 1, 256>}, {pipeline_mode = #tpu.pipeline_mode<synchronous>, transform_indices = @transform_8, window_bounds = array<i64: 1, 1>}, {transform_indices = @transform_9, window_bounds = array<i64: 1, 8>}]} {
    %c0 = arith.constant 0 : index
    %c0_0 = arith.constant 0 : index
    %0 = vector.load %arg1[%c0, %c0_0] : memref<8x24xf32, #tpu.memory_space<vmem>>, vector<8x24xf32>
    %1 = arith.truncf %0 : vector<8x24xf32> to vector<8x24xbf16>
    %c0_1 = arith.constant 0 : index
    %c0_2 = arith.constant 0 : index
    %2 = vector.load %arg3[%c0_1, %c0_2] : memref<24x256xbf16, #tpu.memory_space<vmem>>, vector<24x256xbf16>
    %cst = arith.constant dense<0.000000e+00> : vector<8x256xf32>
    %3 = tpu.matmul %1, %2, %cst {dimension_numbers = #tpu.dot_dimension_numbers<[1], [0], [0], [1], [0, 0, 1, 1], [], []>} : vector<8x24xbf16>, vector<24x256xbf16>, vector<8x256xf32> -> vector<8x256xf32>
    %c0_3 = arith.constant 0 : index
    %c0_4 = arith.constant 0 : index
    %4 = vector.load %arg2[%c0_3, %c0_4] : memref<8x8xf32, #tpu.memory_space<vmem>>, vector<8x8xf32>
    %5 = arith.truncf %4 : vector<8x8xf32> to vector<8x8xbf16>
    %c0_5 = arith.constant 0 : index
    %c0_6 = arith.constant 0 : index
    %6 = vector.load %arg4[%c0_5, %c0_6] : memref<8x256xbf16, #tpu.memory_space<vmem>>, vector<8x256xbf16>
    %cst_7 = arith.constant dense<0.000000e+00> : vector<8x256xf32>
    %7 = tpu.matmul %5, %6, %cst_7 {dimension_numbers = #tpu.dot_dimension_numbers<[1], [0], [0], [1], [0, 0, 1, 1], [], []>} : vector<8x8xbf16>, vector<8x256xbf16>, vector<8x256xf32> -> vector<8x256xf32>
    %8 = arith.addf %3, %7 : vector<8x256xf32>
    %c0_8 = arith.constant 0 : index
    %c0_9 = arith.constant 0 : index
    %9 = vector.load %arg5[%c0_8, %c0_9] : memref<1x256xf32, #tpu.memory_space<vmem>>, vector<1x256xf32>
    %10 = vector.broadcast %9 : vector<1x256xf32> to vector<8x256xf32>
    %11 = arith.addf %8, %10 : vector<8x256xf32>
    %cst_10 = arith.constant 0.000000e+00 : f32
    %12 = vector.broadcast %cst_10 : f32 to vector<8x256xf32>
    %13 = arith.maximumf %11, %12 : vector<8x256xf32>
    %14 = arith.truncf %13 : vector<8x256xf32> to vector<8x256xbf16>
    %c0_11 = arith.constant 0 : index
    %c0_12 = arith.constant 0 : index
    %15 = vector.load %arg6[%c0_11, %c0_12] : memref<256x256xbf16, #tpu.memory_space<vmem>>, vector<256x256xbf16>
    %cst_13 = arith.constant dense<0.000000e+00> : vector<8x256xf32>
    %16 = tpu.matmul %14, %15, %cst_13 {dimension_numbers = #tpu.dot_dimension_numbers<[1], [0], [0], [1], [0, 0, 1, 1], [], []>} : vector<8x256xbf16>, vector<256x256xbf16>, vector<8x256xf32> -> vector<8x256xf32>
    %c0_14 = arith.constant 0 : index
    %c0_15 = arith.constant 0 : index
    %17 = vector.load %arg7[%c0_14, %c0_15] : memref<1x256xf32, #tpu.memory_space<vmem>>, vector<1x256xf32>
    %18 = vector.broadcast %17 : vector<1x256xf32> to vector<8x256xf32>
    %19 = arith.addf %16, %18 : vector<8x256xf32>
    %cst_16 = arith.constant 0.000000e+00 : f32
    %20 = vector.broadcast %cst_16 : f32 to vector<8x256xf32>
    %21 = arith.maximumf %19, %20 : vector<8x256xf32>
    %c0_17 = arith.constant 0 : index
    %c0_18 = arith.constant 0 : index
    %22 = vector.load %arg8[%c0_17, %c0_18] : memref<1x256xbf16, #tpu.memory_space<vmem>>, vector<1x256xbf16>
    %23 = arith.truncf %21 : vector<8x256xf32> to vector<8x256xbf16>
    %cst_19 = arith.constant dense<0.000000e+00> : vector<1x8xf32>
    %24 = tpu.matmul %22, %23, %cst_19 {dimension_numbers = #tpu.dot_dimension_numbers<[1], [1], [0], [0], [0, 0, 1, 0], [], []>} : vector<1x256xbf16>, vector<8x256xbf16>, vector<1x8xf32> -> vector<1x8xf32>
    %c0_20 = arith.constant 0 : index
    %c0_21 = arith.constant 0 : index
    %25 = vector.load %arg9[%c0_20, %c0_21] : memref<1x1xf32, #tpu.memory_space<vmem>>, vector<1x1xf32>
    %26 = vector.broadcast %25 : vector<1x1xf32> to vector<1x8xf32>
    %27 = arith.addf %24, %26 : vector<1x8xf32>
    %c0_22 = arith.constant 0 : index
    %c0_23 = arith.constant 0 : index
    %28 = vector.load %arg10[%c0_22, %c0_23] : memref<1x8xf32, #tpu.memory_space<vmem>>, vector<1x8xf32>
    tpu.vector_store %arg10[%c0_22, %c0_23], %27 {strides = array<i32>} : memref<1x8xf32, #tpu.memory_space<vmem>>, vector<1x8xf32>,
    return
  }
  func.func @transform_0(%arg0: i32) -> (i32, i32) {
    %c0_i32 = arith.constant 0 : i32
    %c0_i32_0 = arith.constant 0 : i32
    return %arg0, %c0_i32 : i32, i32
  }
  func.func @transform_1(%arg0: i32) -> (i32, i32) {
    %c0_i32 = arith.constant 0 : i32
    %c0_i32_0 = arith.constant 0 : i32
    return %arg0, %c0_i32 : i32, i32
  }
  func.func @transform_2(%arg0: i32) -> (i32, i32) {
    %c0_i32 = arith.constant 0 : i32
    %c0_i32_0 = arith.constant 0 : i32
    %c0_i32_1 = arith.constant 0 : i32
    return %c0_i32, %c0_i32_0 : i32, i32
  }
  func.func @transform_3(%arg0: i32) -> (i32, i32) {
    %c0_i32 = arith.constant 0 : i32
    %c0_i32_0 = arith.constant 0 : i32
    %c0_i32_1 = arith.constant 0 : i32
    return %c0_i32, %c0_i32_0 : i32, i32
  }
  func.func @transform_4(%arg0: i32) -> (i32, i32) {
    %c0_i32 = arith.constant 0 : i32
    %c0_i32_0 = arith.constant 0 : i32
    %c0_i32_1 = arith.constant 0 : i32
    return %c0_i32, %c0_i32_0 : i32, i32
  }
  func.func @transform_5(%arg0: i32) -> (i32, i32) {
    %c0_i32 = arith.constant 0 : i32
    %c0_i32_0 = arith.constant 0 : i32
    %c0_i32_1 = arith.constant 0 : i32
    return %c0_i32, %c0_i32_0 : i32, i32
  }
  func.func @transform_6(%arg0: i32) -> (i32, i32) {
    %c0_i32 = arith.constant 0 : i32
    %c0_i32_0 = arith.constant 0 : i32
    %c0_i32_1 = arith.constant 0 : i32
    return %c0_i32, %c0_i32_0 : i32, i32
  }
  func.func @transform_7(%arg0: i32) -> (i32, i32) {
    %c0_i32 = arith.constant 0 : i32
    %c0_i32_0 = arith.constant 0 : i32
    %c0_i32_1 = arith.constant 0 : i32
    return %c0_i32, %c0_i32_0 : i32, i32
  }
  func.func @transform_8(%arg0: i32) -> (i32, i32) {
    %c0_i32 = arith.constant 0 : i32
    %c0_i32_0 = arith.constant 0 : i32
    %c0_i32_1 = arith.constant 0 : i32
    return %c0_i32, %c0_i32_0 : i32, i32
  }
  func.func @transform_9(%arg0: i32) -> (i32, i32) {
    %c0_i32 = arith.constant 0 : i32
    %c0_i32_0 = arith.constant 0 : i32
    return %arg0, %c0_i32 : i32, i32
  }
}

</mosaic_0001>

<llo_original>
// kernel: tpu_custom_call.1
$region0: #{tpu_custom_call.1}
  #allocation0 [shape = 'u32[]', space=smem, size = 0x4, offset = 0x4, fixed_abs, tag = 'smem constant byte address 0x4 - core index']
  #allocation1 [shape = 'u32[72,128]{1,0:T(1,128)}', space=vmem, size = 0x9000, scoped, tag = 'internal scratch']
  #allocation2 [shape = 'f32[1,1]{1,0:T(1,128)S(1)}', space=vmem, size = 0x200, scoped, tag = 'scoped memory for tpu_custom_call.1']
  %s0 = inlined_call_operand.hbm [shape: f32[8,24], index: 0, kind: input, shape index: {}]
  %s1 = inlined_call_operand.hbm [shape: f32[8,8], index: 1, kind: input, shape index: {}]
  %s2 = inlined_call_operand.hbm [shape: bf16[24,256], index: 2, kind: input, shape index: {}]
  %s3 = inlined_call_operand.hbm [shape: bf16[8,256], index: 3, kind: input, shape index: {}]
  %s4 = inlined_call_operand.vmem [shape: f32[1,256], index: 4, kind: input, shape index: {}]
  %s5 = inlined_call_operand.hbm [shape: bf16[256,256], index: 5, kind: input, shape index: {}]
  %s6 = inlined_call_operand.vmem [shape: f32[1,256], index: 6, kind: input, shape index: {}]
  %s7 = inlined_call_operand.vmem [shape: bf16[1,256], index: 7, kind: input, shape index: {}]
  %s8 = inlined_call_operand.<no memory space> [shape: f32[1,1], index: 8, kind: input, shape index: {}]
  %s9 = inlined_call_operand.hbm [shape: f32[1,8], index: 9, kind: output, shape index: {}]
  %s10 = sld [smem:[#allocation0]]
  $region66: #{tpu_custom_call.1} parent=0
    _
  %s12 = ssub.s32 1, %s10
  %s13 = scalar_select 0, %s12, %s10
  %v14 = vstv %s8
  %15 = vst [vmem:[#allocation2] sm:$0x1] %v14
  $region1: #{tpu_custom_call.1} parent=0
    #allocation3 [shape = 'u8[4096]{0}', space=vmem, size = 0x1000, scoped, tag = 'input window, operand 0, single buffered']
    #allocation4 [shape = 's32[1]{0}', space=sflag, size = 0x4, scoped, tag = 'scoped memory for tpu_custom_call.1']
    #allocation5 [shape = 's32[1]{0}', space=sflag, size = 0x4, scoped, tag = 'scoped memory for tpu_custom_call.1']
    #allocation6 [shape = 'u8[4096]{0}', space=vmem, size = 0x1000, scoped, tag = 'input window, operand 1, single buffered']
    #allocation7 [shape = 's32[1]{0}', space=sflag, size = 0x4, scoped, tag = 'scoped memory for tpu_custom_call.1']
    #allocation8 [shape = 'u8[12288]{0}', space=vmem, size = 0x3000, scoped, tag = 'input window, operand 2, single buffered']
    #allocation9 [shape = 'u8[4096]{0}', space=vmem, size = 0x1000, scoped, tag = 'input window, operand 3, single buffered']
    #allocation10 [shape = 's32[1]{0}', space=sflag, size = 0x4, scoped, tag = 'scoped memory for tpu_custom_call.1']
    #allocation11 [shape = 'u8[131072]{0}', space=vmem, size = 0x20000, scoped, tag = 'input window, operand 5, single buffered']
    #allocation12 [shape = 'u8[512]{0}', space=vmem, size = 0x400, scoped, tag = 'output window, operand 0, single buffered']
    %16 = vsyncpa [#allocation4], 0
    %17 = vsyncpa [#allocation7], 0
    %18 = vsyncpa [#allocation10], 0
    %19 = vsyncpa [#allocation5], 0
    // Predicated region
    $region2: #{tpu_custom_call.1} parent=1 // pred_check
      _
    $region3: #{tpu_custom_call.1} parent=1 // pred_check_branch
      %21 = sbr.rel (0) target = $region5
    $region4: #{tpu_custom_call.1} parent=1 // pred_region
      %23 = vsyncadd [#allocation4], 0
      %s25 = sshll.u32 %s0, 4
      %s26 = int_to_ptr.hbm [resolvable:$true] %s25
      %s27 = sshll.u32 [#allocation3], 4
      %s28 = int_to_ptr.vmem [resolvable:$true] %s27
      %30 = dma.hbm_to_vmem [thread:$0]  %s26, 128, %s28, [#allocation4]
    $region5: #{tpu_custom_call.1} parent=1 // pred_fallthru
      _
    // Predicated region
    $region6: #{tpu_custom_call.1} parent=1 // pred_check
      _
    $region7: #{tpu_custom_call.1} parent=1 // pred_check_branch
      %32 = sbr.rel (0) target = $region9
    $region8: #{tpu_custom_call.1} parent=1 // pred_region
      %34 = vsyncadd [#allocation7], 0
      %s36 = sshll.u32 %s1, 4
      %s37 = int_to_ptr.hbm [resolvable:$true] %s36
      %s38 = sshll.u32 [#allocation6], 4
      %s39 = int_to_ptr.vmem [resolvable:$true] %s38
      %41 = dma.hbm_to_vmem [thread:$0]  %s37, 128, %s39, [#allocation7]
    $region9: #{tpu_custom_call.1} parent=1 // pred_fallthru
      _
    // Predicated region
    $region10: #{tpu_custom_call.1} parent=1 // pred_check
      _
    $region11: #{tpu_custom_call.1} parent=1 // pred_check_branch
      %43 = sbr.rel (0) target = $region13
    $region12: #{tpu_custom_call.1} parent=1 // pred_region
      %45 = vsyncadd [#allocation7], 0
      %s46 = sshll.u32 %s2, 4
      %s47 = int_to_ptr.hbm [resolvable:$true] %s46
      %s48 = sshll.u32 [#allocation8], 4
      %s49 = int_to_ptr.vmem [resolvable:$true] %s48
      %54 = dma.hbm_to_vmem [thread:$0]  %s47, 384, %s49, [#allocation7], 128, 128, 8
    $region13: #{tpu_custom_call.1} parent=1 // pred_fallthru
      _
    // Predicated region
    $region14: #{tpu_custom_call.1} parent=1 // pred_check
      _
    $region15: #{tpu_custom_call.1} parent=1 // pred_check_branch
      %56 = sbr.rel (0) target = $region17
    $region16: #{tpu_custom_call.1} parent=1 // pred_region
      %58 = vsyncadd [#allocation10], 0
      %s60 = sshll.u32 %s3, 4
      %s61 = int_to_ptr.hbm [resolvable:$true] %s60
      %s62 = sshll.u32 [#allocation9], 4
      %s63 = int_to_ptr.vmem [resolvable:$true] %s62
      %65 = dma.hbm_to_vmem [thread:$0]  %s61, 128, %s63, [#allocation10]
    $region17: #{tpu_custom_call.1} parent=1 // pred_fallthru
      _
    // Predicated region
    $region18: #{tpu_custom_call.1} parent=1 // pred_check
      _
    $region19: #{tpu_custom_call.1} parent=1 // pred_check_branch
      %67 = sbr.rel (0) target = $region21
    $region20: #{tpu_custom_call.1} parent=1 // pred_region
      _
    $region21: #{tpu_custom_call.1} parent=1 // pred_fallthru
      _
    // Predicated region
    $region22: #{tpu_custom_call.1} parent=1 // pred_check
      _
    $region23: #{tpu_custom_call.1} parent=1 // pred_check_branch
      %69 = sbr.rel (0) target = $region25
    $region24: #{tpu_custom_call.1} parent=1 // pred_region
      %71 = vsyncadd [#allocation10], 0
      %s72 = sshll.u32 %s5, 4
      %s73 = int_to_ptr.hbm [resolvable:$true] %s72
      %s74 = sshll.u32 [#allocation11], 4
      %s75 = int_to_ptr.vmem [resolvable:$true] %s74
      %80 = dma.hbm_to_vmem [thread:$0]  %s73, 4096, %s75, [#allocation10], 128, 128, 8
    $region25: #{tpu_custom_call.1} parent=1 // pred_fallthru
      _
    // Predicated region
    $region26: #{tpu_custom_call.1} parent=1 // pred_check
      _
    $region27: #{tpu_custom_call.1} parent=1 // pred_check_branch
      %82 = sbr.rel (0) target = $region29
    $region28: #{tpu_custom_call.1} parent=1 // pred_region
      _
    $region29: #{tpu_custom_call.1} parent=1 // pred_fallthru
      _
    // Predicated region
    $region30: #{tpu_custom_call.1} parent=1 // pred_check
      _
    $region31: #{tpu_custom_call.1} parent=1 // pred_check_branch
      %84 = sbr.rel (0) target = $region33
    $region32: #{tpu_custom_call.1} parent=1 // pred_region
      _
    $region33: #{tpu_custom_call.1} parent=1 // pred_fallthru
      _
    // Predicated region
    $region34: #{tpu_custom_call.1} parent=1 // pred_check
      _
    $region35: #{tpu_custom_call.1} parent=1 // pred_check_branch
      %86 = sbr.rel (0) target = $region37
    $region36: #{tpu_custom_call.1} parent=1 // pred_region
      _
    $region37: #{tpu_custom_call.1} parent=1 // pred_fallthru
      _
    // Predicated region
    $region38: #{tpu_custom_call.1} parent=1 // pred_check
      _
    $region39: #{tpu_custom_call.1} parent=1 // pred_check_branch
      %88 = sbr.rel (0) target = $region41
    $region40: #{tpu_custom_call.1} parent=1 // pred_region
      %90 = dma.done [#allocation4], 128
    $region41: #{tpu_custom_call.1} parent=1 // pred_fallthru
      _
    // Predicated region
    $region42: #{tpu_custom_call.1} parent=1 // pred_check
      _
    $region43: #{tpu_custom_call.1} parent=1 // pred_check_branch
      %92 = sbr.rel (0) target = $region45
    $region44: #{tpu_custom_call.1} parent=1 // pred_region
      %94 = dma.done [#allocation7], 128
    $region45: #{tpu_custom_call.1} parent=1 // pred_fallthru
      _
    // Predicated region
    $region46: #{tpu_custom_call.1} parent=1 // pred_check
      _
    $region47: #{tpu_custom_call.1} parent=1 // pred_check_branch
      %96 = sbr.rel (0) target = $region49
    $region48: #{tpu_custom_call.1} parent=1 // pred_region
      %98 = dma.done [#allocation7], 384
    $region49: #{tpu_custom_call.1} parent=1 // pred_fallthru
      _
    // Predicated region
    $region50: #{tpu_custom_call.1} parent=1 // pred_check
      _
    $region51: #{tpu_custom_call.1} parent=1 // pred_check_branch
      %100 = sbr.rel (0) target = $region53
    $region52: #{tpu_custom_call.1} parent=1 // pred_region
      %102 = dma.done [#allocation10], 128
    $region53: #{tpu_custom_call.1} parent=1 // pred_fallthru
      _
    // Predicated region
    $region54: #{tpu_custom_call.1} parent=1 // pred_check
      _
    $region55: #{tpu_custom_call.1} parent=1 // pred_check_branch
      %104 = sbr.rel (0) target = $region57
    $region56: #{tpu_custom_call.1} parent=1 // pred_region
      %106 = dma.done [#allocation10], 4096
    $region57: #{tpu_custom_call.1} parent=1 // pred_fallthru
      _
    %v108 = vld [vmem:[#allocation3] sm:$0xff]
    %v109 = vpack.c.bf16 %v108, %v108
    %v110 = vld [vmem:[#allocation8] sm:$0xff]
    %v111 = vld [vmem:[#allocation8 + $0x8] sm:$0xff]
    %v112 = vld [vmem:[#allocation8 + $0x10] sm:$0xff]
    %v113 = vld [vmem:[#allocation6] sm:$0xff]
    %v114 = vpack.c.bf16 %v113, %v113
    %v115 = vld [vmem:[#allocation9] sm:$0xff]
    %v117 = vunpack.c.l.b16 %v115
    %v118 = vunpack.c.h.b16 %v115
    %v119 = vpack.c.b16 %v117, %v117
    %v120 = vpack.c.b16 %v118, %v118
    %vm121 = vcmask 64512
    %v123 = vsel %vm121, %v114, 0
    %vm125 = vcmask 1043456
    %v127 = vsel %vm125, %v119, 0
    %v130 = vsel %vm125, %v120, 0
    %132 = vmatpush.bf16.msra.mxu0 0
    %133 = vmatpush.bf16.msra.mxu0 0
    %134 = vmatpush.bf16.msra.mxu0 0
    %135 = vmatpush.bf16.msra.mxu0 0
    %136 = vmatpush.bf16.msra.mxu0 0
    %137 = vmatpush.bf16.msra.mxu0 0
    %138 = vmatpush.bf16.msra.mxu0 0
    %139 = vmatpush.bf16.msra.mxu0 %v127
    %140 = vmatmul.bf16.gmra.mxu0 %v123
    %v141 = vpop.f32.mrf.mxu0
    %v142 = vadd.f32 0.0, %v141
    %v143 = vpop.f32.mrf.mxu0
    %144 = vdwg.mxu0
    %145 = vmatpush.bf16.msra.mxu0 0
    %146 = vmatpush.bf16.msra.mxu0 0
    %147 = vmatpush.bf16.msra.mxu0 0
    %148 = vmatpush.bf16.msra.mxu0 0
    %149 = vmatpush.bf16.msra.mxu0 0
    %150 = vmatpush.bf16.msra.mxu0 0
    %151 = vmatpush.bf16.msra.mxu0 0
    %152 = vmatpush.bf16.msra.mxu0 %v130
    %153 = vmatmul.bf16.gmra.mxu0 %v123
    %v154 = vpop.f32.mrf.mxu0
    %v155 = vadd.f32 0.0, %v154
    %v156 = vpop.f32.mrf.mxu0
    %157 = vdwg.mxu0
    %v161 = vunpack.c.l.b16 %v110
    %v162 = vunpack.c.h.b16 %v110
    %v163 = vunpack.c.l.b16 %v111
    %v164 = vunpack.c.h.b16 %v111
    %v165 = vunpack.c.l.b16 %v112
    %v166 = vunpack.c.h.b16 %v112
    %v167 = vpack.c.b16 %v163, %v161
    %v168 = vpack.c.b16 %v164, %v162
    %v169 = vpack.c.b16 %v165, %v165
    %v170 = vpack.c.b16 %v166, %v166
    %vm173 = vcmask 195584
    %v175 = vsel %vm173, %v109, 0
    %v178 = vsel %vm125, %v169, 0
    %v181 = vsel %vm125, %v170, 0
    %183 = vmatpush.bf16.msra.mxu0 0
    %184 = vmatpush.bf16.msra.mxu0 0
    %185 = vmatpush.bf16.msra.mxu0 0
    %186 = vmatpush.bf16.msra.mxu0 0
    %187 = vmatpush.bf16.msra.mxu0 0
    %188 = vmatpush.bf16.msra.mxu0 0
    %189 = vmatpush.bf16.msra.mxu0 %v178
    %190 = vmatpush.bf16.msra.mxu0 %v167
    %191 = vmatmul.bf16.gmra.mxu0 %v175
    %v192 = vpop.f32.mrf.mxu0
    %v193 = vadd.f32 %v142, %v192
    %v194 = vpop.f32.mrf.mxu0
    %195 = vdwg.mxu0
    %196 = vmatpush.bf16.msra.mxu0 0
    %197 = vmatpush.bf16.msra.mxu0 0
    %198 = vmatpush.bf16.msra.mxu0 0
    %199 = vmatpush.bf16.msra.mxu0 0
    %200 = vmatpush.bf16.msra.mxu0 0
    %201 = vmatpush.bf16.msra.mxu0 0
    %202 = vmatpush.bf16.msra.mxu0 %v181
    %203 = vmatpush.bf16.msra.mxu0 %v168
    %204 = vmatmul.bf16.gmra.mxu0 %v175
    %v205 = vpop.f32.mrf.mxu0
    %v206 = vadd.f32 %v155, %v205
    %v207 = vpop.f32.mrf.mxu0
    %208 = vdwg.mxu0
    %v209 = vld [vmem:[%s4] sm:$0x3]
    %v211 = vperm.slane %v209, 0
    %v212 = vperm.slane %v209, 1
    %v215 = vadd.f32 %v193, %v211
    %v216 = vadd.f32 %v206, %v212
    %v217 = vmax.f32 %v215, 0.0
    %v218 = vmax.f32 %v216, 0.0
    %v219 = vpack.c.bf16 %v217, %v217
    %v220 = vpack.c.bf16 %v218, %v218
    %v221 = vld [vmem:[#allocation11] sm:$0xff]
    %v222 = vld [vmem:[#allocation11 + $0x8] sm:$0xff]
    %v223 = vld [vmem:[#allocation11 + $0x10] sm:$0xff]
    %v224 = vld [vmem:[#allocation11 + $0x18] sm:$0xff]
    %v225 = vld [vmem:[#allocation11 + $0x20] sm:$0xff]
    %v226 = vld [vmem:[#allocation11 + $0x28] sm:$0xff]
    %v227 = vld [vmem:[#allocation11 + $0x30] sm:$0xff]
    %v228 = vld [vmem:[#allocation11 + $0x38] sm:$0xff]
    %v229 = vld [vmem:[#allocation11 + $0x40] sm:$0xff]
    %v230 = vld [vmem:[#allocation11 + $0x48] sm:$0xff]
    %v231 = vld [vmem:[#allocation11 + $0x50] sm:$0xff]
    %v232 = vld [vmem:[#allocation11 + $0x58] sm:$0xff]
    %v233 = vld [vmem:[#allocation11 + $0x60] sm:$0xff]
    %v234 = vld [vmem:[#allocation11 + $0x68] sm:$0xff]
    %v235 = vld [vmem:[#allocation11 + $0x70] sm:$0xff]
    %v236 = vld [vmem:[#allocation11 + $0x78] sm:$0xff]
    %v237 = vld [vmem:[#allocation11 + $0x80] sm:$0xff]
    %v238 = vld [vmem:[#allocation11 + $0x88] sm:$0xff]
    %v239 = vld [vmem:[#allocation11 + $0x90] sm:$0xff]
    %v240 = vld [vmem:[#allocation11 + $0x98] sm:$0xff]
    %v241 = vld [vmem:[#allocation11 + $0xa0] sm:$0xff]
    %v242 = vld [vmem:[#allocation11 + $0xa8] sm:$0xff]
    %v243 = vld [vmem:[#allocation11 + $0xb0] sm:$0xff]
    %v244 = vld [vmem:[#allocation11 + $0xb8] sm:$0xff]
    %v245 = vld [vmem:[#allocation11 + $0xc0] sm:$0xff]
    %v246 = vld [vmem:[#allocation11 + $0xc8] sm:$0xff]
    %v247 = vld [vmem:[#allocation11 + $0xd0] sm:$0xff]
    %v248 = vld [vmem:[#allocation11 + $0xd8] sm:$0xff]
    %v249 = vld [vmem:[#allocation11 + $0xe0] sm:$0xff]
    %v250 = vld [vmem:[#allocation11 + $0xe8] sm:$0xff]
    %v251 = vld [vmem:[#allocation11 + $0xf0] sm:$0xff]
    %v252 = vld [vmem:[#allocation11 + $0xf8] sm:$0xff]
    %v253 = vld [vmem:[%s6] sm:$0x3]
    %v255 = vperm.slane %v253, 0
    %v256 = vperm.slane %v253, 1
    %v291 = vunpack.c.l.b16 %v221
    %v292 = vunpack.c.h.b16 %v221
    %v293 = vunpack.c.l.b16 %v222
    %v294 = vunpack.c.h.b16 %v222
    %v295 = vunpack.c.l.b16 %v223
    %v296 = vunpack.c.h.b16 %v223
    %v297 = vunpack.c.l.b16 %v224
    %v298 = vunpack.c.h.b16 %v224
    %v299 = vunpack.c.l.b16 %v225
    %v300 = vunpack.c.h.b16 %v225
    %v301 = vunpack.c.l.b16 %v226
    %v302 = vunpack.c.h.b16 %v226
    %v303 = vunpack.c.l.b16 %v227
    %v304 = vunpack.c.h.b16 %v227
    %v305 = vunpack.c.l.b16 %v228
    %v306 = vunpack.c.h.b16 %v228
    %v307 = vunpack.c.l.b16 %v229
    %v308 = vunpack.c.h.b16 %v229
    %v309 = vunpack.c.l.b16 %v230
    %v310 = vunpack.c.h.b16 %v230
    %v311 = vunpack.c.l.b16 %v231
    %v312 = vunpack.c.h.b16 %v231
    %v313 = vunpack.c.l.b16 %v232
    %v314 = vunpack.c.h.b16 %v232
    %v315 = vunpack.c.l.b16 %v233
    %v316 = vunpack.c.h.b16 %v233
    %v317 = vunpack.c.l.b16 %v234
    %v318 = vunpack.c.h.b16 %v234
    %v319 = vunpack.c.l.b16 %v235
    %v320 = vunpack.c.h.b16 %v235
    %v321 = vunpack.c.l.b16 %v236
    %v322 = vunpack.c.h.b16 %v236
    %v323 = vunpack.c.l.b16 %v237
    %v324 = vunpack.c.h.b16 %v237
    %v325 = vunpack.c.l.b16 %v238
    %v326 = vunpack.c.h.b16 %v238
    %v327 = vunpack.c.l.b16 %v239
    %v328 = vunpack.c.h.b16 %v239
    %v329 = vunpack.c.l.b16 %v240
    %v330 = vunpack.c.h.b16 %v240
    %v331 = vunpack.c.l.b16 %v241
    %v332 = vunpack.c.h.b16 %v241
    %v333 = vunpack.c.l.b16 %v242
    %v334 = vunpack.c.h.b16 %v242
    %v335 = vunpack.c.l.b16 %v243
    %v336 = vunpack.c.h.b16 %v243
    %v337 = vunpack.c.l.b16 %v244
    %v338 = vunpack.c.h.b16 %v244
    %v339 = vunpack.c.l.b16 %v245
    %v340 = vunpack.c.h.b16 %v245
    %v341 = vunpack.c.l.b16 %v246
    %v342 = vunpack.c.h.b16 %v246
    %v343 = vunpack.c.l.b16 %v247
    %v344 = vunpack.c.h.b16 %v247
    %v345 = vunpack.c.l.b16 %v248
    %v346 = vunpack.c.h.b16 %v248
    %v347 = vunpack.c.l.b16 %v249
    %v348 = vunpack.c.h.b16 %v249
    %v349 = vunpack.c.l.b16 %v250
    %v350 = vunpack.c.h.b16 %v250
    %v351 = vunpack.c.l.b16 %v251
    %v352 = vunpack.c.h.b16 %v251
    %v353 = vunpack.c.l.b16 %v252
    %v354 = vunpack.c.h.b16 %v252
    %v355 = vpack.c.b16 %v293, %v291
    %v356 = vpack.c.b16 %v294, %v292
    %v357 = vpack.c.b16 %v297, %v295
    %v358 = vpack.c.b16 %v298, %v296
    %v359 = vpack.c.b16 %v301, %v299
    %v360 = vpack.c.b16 %v302, %v300
    %v361 = vpack.c.b16 %v305, %v303
    %v362 = vpack.c.b16 %v306, %v304
    %v363 = vpack.c.b16 %v309, %v307
    %v364 = vpack.c.b16 %v310, %v308
    %v365 = vpack.c.b16 %v313, %v311
    %v366 = vpack.c.b16 %v314, %v312
    %v367 = vpack.c.b16 %v317, %v315
    %v368 = vpack.c.b16 %v318, %v316
    %v369 = vpack.c.b16 %v321, %v319
    %v370 = vpack.c.b16 %v322, %v320
    %v371 = vpack.c.b16 %v325, %v323
    %v372 = vpack.c.b16 %v326, %v324
    %v373 = vpack.c.b16 %v329, %v327
    %v374 = vpack.c.b16 %v330, %v328
    %v375 = vpack.c.b16 %v333, %v331
    %v376 = vpack.c.b16 %v334, %v332
    %v377 = vpack.c.b16 %v337, %v335
    %v378 = vpack.c.b16 %v338, %v336
    %v379 = vpack.c.b16 %v341, %v339
    %v380 = vpack.c.b16 %v342, %v340
    %v381 = vpack.c.b16 %v345, %v343
    %v382 = vpack.c.b16 %v346, %v344
    %v383 = vpack.c.b16 %v349, %v347
    %v384 = vpack.c.b16 %v350, %v348
    %v385 = vpack.c.b16 %v353, %v351
    %v386 = vpack.c.b16 %v354, %v352
    %419 = vmatpush.bf16.msra.mxu0 %v369
    %420 = vmatpush.bf16.msra.mxu0 %v367
    %421 = vmatpush.bf16.msra.mxu0 %v365
    %422 = vmatpush.bf16.msra.mxu0 %v363
    %423 = vmatpush.bf16.msra.mxu0 %v361
    %424 = vmatpush.bf16.msra.mxu0 %v359
    %425 = vmatpush.bf16.msra.mxu0 %v357
    %426 = vmatpush.bf16.msra.mxu0 %v355
    %427 = vmatmul.bf16.gmra.mxu0 %v219
    %v428 = vpop.f32.mrf.mxu0
    %v429 = vadd.f32 %v255, %v428
    %v430 = vpop.f32.mrf.mxu0
    %431 = vdwg.mxu0
    %432 = vmatpush.bf16.msra.mxu0 %v385
    %433 = vmatpush.bf16.msra.mxu0 %v383
    %434 = vmatpush.bf16.msra.mxu0 %v381
    %435 = vmatpush.bf16.msra.mxu0 %v379
    %436 = vmatpush.bf16.msra.mxu0 %v377
    %437 = vmatpush.bf16.msra.mxu0 %v375
    %438 = vmatpush.bf16.msra.mxu0 %v373
    %439 = vmatpush.bf16.msra.mxu0 %v371
    %440 = vmatmul.bf16.gmra.mxu0 %v220
    %v441 = vpop.f32.mrf.mxu0
    %v442 = vadd.f32 %v429, %v441
    %v443 = vpop.f32.mrf.mxu0
    %444 = vdwg.mxu0
    %445 = vmatpush.bf16.msra.mxu0 %v370
    %446 = vmatpush.bf16.msra.mxu0 %v368
    %447 = vmatpush.bf16.msra.mxu0 %v366
    %448 = vmatpush.bf16.msra.mxu0 %v364
    %449 = vmatpush.bf16.msra.mxu0 %v362
    %450 = vmatpush.bf16.msra.mxu0 %v360
    %451 = vmatpush.bf16.msra.mxu0 %v358
    %452 = vmatpush.bf16.msra.mxu0 %v356
    %453 = vmatmul.bf16.gmra.mxu0 %v219
    %v454 = vpop.f32.mrf.mxu0
    %v455 = vadd.f32 %v256, %v454
    %v456 = vpop.f32.mrf.mxu0
    %457 = vdwg.mxu0
    %458 = vmatpush.bf16.msra.mxu0 %v386
    %459 = vmatpush.bf16.msra.mxu0 %v384
    %460 = vmatpush.bf16.msra.mxu0 %v382
    %461 = vmatpush.bf16.msra.mxu0 %v380
    %462 = vmatpush.bf16.msra.mxu0 %v378
    %463 = vmatpush.bf16.msra.mxu0 %v376
    %464 = vmatpush.bf16.msra.mxu0 %v374
    %465 = vmatpush.bf16.msra.mxu0 %v372
    %466 = vmatmul.bf16.gmra.mxu0 %v220
    %v467 = vpop.f32.mrf.mxu0
    %v468 = vadd.f32 %v455, %v467
    %v469 = vpop.f32.mrf.mxu0
    %470 = vdwg.mxu0
    %v471 = vmax.f32 %v442, 0.0
    %v472 = vmax.f32 %v468, 0.0
    %v473 = vld [vmem:[%s7] sm:$0x3]
    %v474 = vpack.c.bf16 %v471, %v471
    %v475 = vpack.c.bf16 %v472, %v472
    %v476 = vld [vmem:[#allocation2] sm:$0x1]
    %478 = vset.pattern.permute.xlu0 0
    %479 = vperm.xlu0 %478, %v476
    %v480 = vpop.permute.xlu0 %479
    %v482 = vperm.slane %v480, 0
    %484 = vst [vmem:[#allocation1] ss:$9 sm:$0xff] %v473
    %v485 = vld [vmem:[#allocation1] sm:$0xff]
    %v486 = vld [vmem:[#allocation1 + $0x9] sm:$0xff]
    %489 = vmatpush.bf16.xpose.msra.mxu0 0
    %490 = vmatpush.bf16.xpose.msra.mxu0 0
    %491 = vmatpush.bf16.xpose.msra.mxu0 0
    %492 = vmatpush.bf16.xpose.msra.mxu0 0
    %493 = vmatpush.bf16.xpose.msra.mxu0 0
    %494 = vmatpush.bf16.xpose.msra.mxu0 0
    %495 = vmatpush.bf16.xpose.msra.mxu0 0
    %496 = vmatpush.bf16.xpose.msra.mxu0 %v474
    %497 = vmatmul.bf16.gmra.mxu0 %v485
    %v498 = vpop.f32.mrf.mxu0
    %v499 = vadd.f32 %v482, %v498
    %v500 = vpop.f32.mrf.mxu0
    %501 = vdwg.mxu0
    %502 = vmatpush.bf16.xpose.msra.mxu0 0
    %503 = vmatpush.bf16.xpose.msra.mxu0 0
    %504 = vmatpush.bf16.xpose.msra.mxu0 0
    %505 = vmatpush.bf16.xpose.msra.mxu0 0
    %506 = vmatpush.bf16.xpose.msra.mxu0 0
    %507 = vmatpush.bf16.xpose.msra.mxu0 0
    %508 = vmatpush.bf16.xpose.msra.mxu0 0
    %509 = vmatpush.bf16.xpose.msra.mxu0 %v475
    %510 = vmatmul.bf16.gmra.mxu0 %v486
    %v511 = vpop.f32.mrf.mxu0
    %v512 = vadd.f32 %v499, %v511
    %v513 = vpop.f32.mrf.mxu0
    %514 = vdwg.mxu0
    %vm515 = vcmask 57344
    %516 = vst.msk [vmem:[#allocation12] sm:$0x1] %vm515, %v512
    // Predicated region
    $region58: #{tpu_custom_call.1} parent=1 // pred_check
      _
    $region59: #{tpu_custom_call.1} parent=1 // pred_check_branch
      %518 = sbr.rel (0) target = $region61
    $region60: #{tpu_custom_call.1} parent=1 // pred_region
      %520 = vsyncadd [#allocation5], 0
      %s522 = sshll.u32 [#allocation12], 4
      %s523 = int_to_ptr.vmem [resolvable:$true] %s522
      %s524 = sshll.u32 %s9, 4
      %s525 = int_to_ptr.hbm [resolvable:$true] %s524
      %527 = dma.vmem_to_hbm [thread:$0]  %s523, 16, %s525, [#allocation5]
    $region61: #{tpu_custom_call.1} parent=1 // pred_fallthru
      _
    // Predicated region
    $region62: #{tpu_custom_call.1} parent=1 // pred_check
      _
    $region63: #{tpu_custom_call.1} parent=1 // pred_check_branch
      %529 = sbr.rel (0) target = $region65
    $region64: #{tpu_custom_call.1} parent=1 // pred_region
      %531 = dma.done [#allocation5], 16
    $region65: #{tpu_custom_call.1} parent=1 // pred_fallthru
      _
    %532 = vsyncpa [#allocation4], 1
    %533 = vsyncpa [#allocation7], 1
    %534 = vsyncpa [#allocation10], 1
    %535 = vsyncpa [#allocation5], 1

</llo_original>
